<compile_context>
chip_gen: v6e
topology: v6e:2x2x1
jax: 0.10.0
libtpu: 0.0.40
codegen_flags: <defaults>
</compile_context>

<pallas_src>
import functools

import jax
import jax.numpy as jnp
from jax.experimental import pallas as pl
from jax.experimental.pallas import tpu as pltpu


_VMEM_TILE_BUDGET = 40 << 20   # budget used when picking the M tile
_VMEM_LIMIT_FLOOR = 32 << 20   # never request less scoped VMEM than this
_VMEM_LIMIT_CAP = 48 << 20     # stay well under v7x's 64 MiB physical VMEM


def _round_up(x, m):
    return (x + m - 1) // m * m


def _vmem_need_bytes(tm, K_pad, E_pad, out_bytes):
    # Resident weight + bias (double-buffered by the default pipeliner even
    # though the constant index_map means they are fetched only once), plus
    # double-buffered patch-input and output tiles.
    resident = 2 * (K_pad * E_pad * 2) + 2 * (E_pad * 4)
    tiles = 2 * tm * K_pad * 2 + 2 * tm * E_pad * out_bytes
    return resident + tiles


def _select_tile_m(M, K_pad, E_pad, out_bytes, tile_m):
    """Pick an M tile that amortizes per-step overhead but fits the VMEM budget."""
    M_min = _round_up(M, 8)
    if M_min <= 256:
        # Tiny problem: single full-extent block (sublane dim is a mult of 8).
        tm = M_min
    else:
        tm = 256
        for cand in (2048, 1024, 512, 256):
            if cand > max(tile_m, 256):
                continue
            if _vmem_need_bytes(cand, K_pad, E_pad, out_bytes) <= _VMEM_TILE_BUDGET:
                tm = cand
                break
        # Don't pad M by more than one tile's worth.
        tm = min(tm, _round_up(M, 256))
        if M >= 512:
            # v7x megacore: keep >= 2 parallel grid steps so both TensorCores
            # get work.  Harmless on v5e/v6e.
            tm = min(tm, _round_up(-(-M // 2), 256))
    return tm, _vmem_need_bytes(tm, K_pad, E_pad, out_bytes)


def _patch_embed_kernel(p_ref, w_ref, b_ref, o_ref):
    # p_ref: (TM, K_pad) bf16 patches; w_ref: (K_pad, E_pad) bf16;
    # b_ref: (1, E_pad) f32.  MXU matmul with f32 accumulation, f32 bias add,
    # single cast on store.
    acc = jnp.dot(p_ref[...], w_ref[...], preferred_element_type=jnp.float32)
    o_ref[...] = (acc + b_ref[...]).astype(o_ref.dtype)


def patch_embed(x, weight, bias, patch_size, *, tile_m=1024,
                compute_dtype=jnp.bfloat16, out_dtype=None):
    """ViT patch embedding, equivalent to
       Conv2d(C, E, kernel=P, stride=P)(x).flatten(2).transpose(1, 2).

    x: (B, C, H, W); weight: (E, C, P, P); bias: (E,).
    Returns (B, Hp*Wp, E) in `out_dtype` (defaults to x.dtype; pass
    jnp.bfloat16 to halve output HBM traffic when downstream accepts bf16).
    """
    B, C, H, W = x.shape
    E = weight.shape[0]
    P = patch_size
    if H % P or W % P:
        raise ValueError("H and W must be divisible by patch_size")
    Hp, Wp = H // P, W // P
    num_patches = Hp * Wp
    M = B * num_patches
    K = C * P * P
    out_dtype = x.dtype if out_dtype is None else jnp.dtype(out_dtype)
    out_bytes = jnp.dtype(out_dtype).itemsize

    # ---- glue: unfold into (M, K) patches, (C, P, P)-major to match OIHW ----
    patches = x.reshape(B, C, Hp, P, Wp, P)
    patches = patches.transpose(0, 2, 4, 1, 3, 5)           # (B, Hp, Wp, C, P, P)
    patches = patches.reshape(M, K).astype(compute_dtype)   # (M, K)   bf16
    w_mat = weight.reshape(E, K).T.astype(compute_dtype)    # (K, E)   bf16
    b_mat = bias.astype(jnp.float32).reshape(1, E)          # (1, E)   f32

    # ---- TPU layout padding: lane-dense K and E, tile-aligned M -------------
    K_pad = _round_up(K, 128)
    E_pad = _round_up(E, 128)
    tm, need_bytes = _select_tile_m(M, K_pad, E_pad, out_bytes, tile_m)
    M_pad = _round_up(M, tm)          # every grid step is a full, unmasked tile

    if (M_pad, K_pad) != (M, K):
        patches = jnp.pad(patches, ((0, M_pad - M), (0, K_pad - K)))
    if (K_pad, E_pad) != (K, E):
        w_mat = jnp.pad(w_mat, ((0, K_pad - K), (0, E_pad - E)))
    if E_pad != E:
        b_mat = jnp.pad(b_mat, ((0, 0), (0, E_pad - E)))

    grid_m = M_pad // tm
    vmem_limit = int(min(max(need_bytes + (4 << 20), _VMEM_LIMIT_FLOOR),
                         _VMEM_LIMIT_CAP))

    cost = pl.CostEstimate(
        flops=2 * M_pad * K_pad * E_pad,
        transcendentals=0,
        bytes_accessed=int(M_pad * K_pad * 2 + K_pad * E_pad * 2 + E_pad * 4
                           + M_pad * E_pad * out_bytes),
    )

    out = pl.pallas_call(
        _patch_embed_kernel,
        out_shape=jax.ShapeDtypeStruct((M_pad, E_pad), out_dtype),
        grid_spec=pltpu.PrefetchScalarGridSpec(
            num_scalar_prefetch=0,
            grid=(grid_m,),
            in_specs=[
                pl.BlockSpec((tm, K_pad), lambda i: (i, 0)),     # streamed over M
                pl.BlockSpec((K_pad, E_pad), lambda i: (0, 0)),  # VMEM-resident
                pl.BlockSpec((1, E_pad), lambda i: (0, 0)),      # VMEM-resident
            ],
            out_specs=pl.BlockSpec((tm, E_pad), lambda i: (i, 0)),
        ),
        compiler_params=pltpu.CompilerParams(
            # Independent M axis -> megacore sharding on v7x, harmless elsewhere.
            dimension_semantics=("parallel",),
            # Explicit scoped-VMEM sizing (v5e default is only 16 MiB; v7x has
            # 64 MiB physical) so large M tiles keep full double-buffering.
            vmem_limit_bytes=vmem_limit,
            # Let XLA fuse the unfold/transpose/cast/pad producer into the
            # kernel's input fetch (avoids an extra HBM round-trip of patches).
            # Verify with xprof/HLO that `patches` is not materialized; if it
            # is, prefer NHWC input or move the unfold into the kernel.
            allow_input_fusion=[True, False, False],
        ),
        cost_estimate=cost,
    )(patches, w_mat, b_mat)

    out = out[:M, :E]                      # strip M / lane padding
    return out.reshape(B, num_patches, E)


if __name__ == "__main__":
    # Small shapes consistent with the module's forward:
    # batch=2, in_chans=4, img_size=16, patch_size=8, embed_dim=32
    B, C, IMG, P, E = 2, 4, 16, 8, 32

    key = jax.random.PRNGKey(0)
    kx, kw, kb = jax.random.split(key, 3)
    x = jax.random.normal(kx, (B, C, IMG, IMG), dtype=jnp.float32)
    # Synthetic conv parameters (shapes from nn.Conv2d(C, E, P, stride=P)).
    weight = jax.random.normal(kw, (E, C, P, P), dtype=jnp.float32) * 0.02
    bias = jax.random.normal(kb, (E,), dtype=jnp.float32) * 0.02

    fn = jax.jit(functools.partial(patch_embed, patch_size=P))
    out = jax.block_until_ready(fn(x, weight, bias))
    assert out.shape == (B, (IMG // P) ** 2, E), out.shape

    # Reference 1: same bf16 inputs through lax conv with f32 accumulation
    # (matches the kernel's MXU numerics) -> tight tolerance.
    ref_bf16 = jax.lax.conv_general_dilated(
        x.astype(jnp.bfloat16), weight.astype(jnp.bfloat16),
        window_strides=(P, P), padding="VALID",
        dimension_numbers=("NCHW", "OIHW", "NCHW"),
        preferred_element_type=jnp.float32)
    ref_bf16 = ref_bf16 + bias.reshape(1, E, 1, 1)
    ref_bf16 = ref_bf16.reshape(B, E, -1).transpose(0, 2, 1)
    assert jnp.allclose(out, ref_bf16, atol=2e-3, rtol=2e-3), (
        float(jnp.max(jnp.abs(out - ref_bf16))))

    # Reference 2: full-f32 conv (the PyTorch module's numerics) -> loose
    # tolerance reflecting only the bf16 input cast.
    ref_f32 = jax.lax.conv_general_dilated(
        x, weight, window_strides=(P, P), padding="VALID",
        dimension_numbers=("NCHW", "OIHW", "NCHW"))
    ref_f32 = ref_f32 + bias.reshape(1, E, 1, 1)
    ref_f32 = ref_f32.reshape(B, E, -1).transpose(0, 2, 1)
    assert jnp.allclose(out, ref_f32, atol=5e-2, rtol=5e-2), (
        float(jnp.max(jnp.abs(out - ref_f32))))

    # Optional reduced-output-bandwidth path (perf-review item): bf16 output.
    fn_bf16 = jax.jit(functools.partial(patch_embed, patch_size=P,
                                        out_dtype=jnp.bfloat16))
    out_bf16 = jax.block_until_ready(fn_bf16(x, weight, bias))
    assert out_bf16.dtype == jnp.bfloat16
    assert jnp.allclose(out_bf16.astype(jnp.float32), ref_bf16,
                        atol=1e-2, rtol=1e-2), (
        float(jnp.max(jnp.abs(out_bf16.astype(jnp.float32) - ref_bf16))))

    print("KERNEL_OK")
</pallas_src>

<mosaic_0001>
module attributes {stable_mosaic.version = 11 : i64} {
  func.func @_patch_embed_kernel(%arg0: i32, %arg1: memref<8x256xbf16, #tpu.memory_space<vmem>>, %arg2: memref<256x128xbf16, #tpu.memory_space<vmem>>, %arg3: memref<1x128xf32, #tpu.memory_space<vmem>>, %arg4: memref<8x128xf32, #tpu.memory_space<vmem>>) attributes {dimension_semantics = [#tpu.dimension_semantics<parallel>], iteration_bounds = array<i64: 1>, scalar_prefetch = 0 : i64, scratch_operands = 0 : i64, tpu.core_type = #tpu.core_type<tc>, window_params = [{transform_indices = @transform_0, window_bounds = array<i64: 8, 256>}, {pipeline_mode = #tpu.pipeline_mode<synchronous>, transform_indices = @transform_1, window_bounds = array<i64: 256, 128>}, {pipeline_mode = #tpu.pipeline_mode<synchronous>, transform_indices = @transform_2, window_bounds = array<i64: 1, 128>}, {transform_indices = @transform_3, window_bounds = array<i64: 8, 128>}]} {
    %c0 = arith.constant 0 : index
    %c0_0 = arith.constant 0 : index
    %0 = vector.load %arg1[%c0, %c0_0] : memref<8x256xbf16, #tpu.memory_space<vmem>>, vector<8x256xbf16>
    %c0_1 = arith.constant 0 : index
    %c0_2 = arith.constant 0 : index
    %1 = vector.load %arg2[%c0_1, %c0_2] : memref<256x128xbf16, #tpu.memory_space<vmem>>, vector<256x128xbf16>
    %cst = arith.constant dense<0.000000e+00> : vector<8x128xf32>
    %2 = tpu.matmul %0, %1, %cst {dimension_numbers = #tpu.dot_dimension_numbers<[1], [0], [0], [1], [0, 0, 1, 1], [], []>} : vector<8x256xbf16>, vector<256x128xbf16>, vector<8x128xf32> -> vector<8x128xf32>
    %c0_3 = arith.constant 0 : index
    %c0_4 = arith.constant 0 : index
    %3 = vector.load %arg3[%c0_3, %c0_4] : memref<1x128xf32, #tpu.memory_space<vmem>>, vector<1x128xf32>
    %4 = vector.broadcast %3 : vector<1x128xf32> to vector<8x128xf32>
    %5 = arith.addf %2, %4 : vector<8x128xf32>
    %c0_5 = arith.constant 0 : index
    %c0_6 = arith.constant 0 : index
    %6 = vector.load %arg4[%c0_5, %c0_6] : memref<8x128xf32, #tpu.memory_space<vmem>>, vector<8x128xf32>
    tpu.vector_store %arg4[%c0_5, %c0_6], %5 {strides = array<i32>} : memref<8x128xf32, #tpu.memory_space<vmem>>, vector<8x128xf32>,
    return
  }
  func.func @transform_0(%arg0: i32) -> (i32, i32) {
    %c0_i32 = arith.constant 0 : i32
    %c0_i32_0 = arith.constant 0 : i32
    return %arg0, %c0_i32 : i32, i32
  }
  func.func @transform_1(%arg0: i32) -> (i32, i32) {
    %c0_i32 = arith.constant 0 : i32
    %c0_i32_0 = arith.constant 0 : i32
    %c0_i32_1 = arith.constant 0 : i32
    return %c0_i32, %c0_i32_0 : i32, i32
  }
  func.func @transform_2(%arg0: i32) -> (i32, i32) {
    %c0_i32 = arith.constant 0 : i32
    %c0_i32_0 = arith.constant 0 : i32
    %c0_i32_1 = arith.constant 0 : i32
    return %c0_i32, %c0_i32_0 : i32, i32
  }
  func.func @transform_3(%arg0: i32) -> (i32, i32) {
    %c0_i32 = arith.constant 0 : i32
    %c0_i32_0 = arith.constant 0 : i32
    return %arg0, %c0_i32 : i32, i32
  }
}

</mosaic_0001>

<llo_original>
// kernel: patch_embed.1
$region0: #{patch_embed.1}
  #allocation0 [shape = 'u32[]', space=smem, size = 0x4, offset = 0x4, fixed_abs, tag = 'smem constant byte address 0x4 - core index']
  #allocation1 [shape = 'u32[144,128]{1,0:T(1,128)}', space=vmem, size = 0x12000, scoped, tag = 'internal scratch']
  %s0 = inlined_call_operand.vmem [shape: bf16[8,256], index: 0, kind: input, shape index: {}]
  %s1 = inlined_call_operand.vmem [shape: bf16[256,128], index: 1, kind: input, shape index: {}]
  %s2 = inlined_call_operand.vmem [shape: f32[1,128], index: 2, kind: input, shape index: {}]
  %s3 = inlined_call_operand.hbm [shape: f32[8,128], index: 3, kind: output, shape index: {}]
  %s4 = sld [smem:[#allocation0]]
  $region22: #{patch_embed.1} parent=0
    _
  %s6 = ssub.s32 1, %s4
  %s7 = scalar_select 0, %s6, %s4
  $region1: #{patch_embed.1} parent=0
    #allocation2 [shape = 'u8[4096]{0}', space=vmem, size = 0x1000, scoped, tag = 'output window, operand 0, single buffered']
    #allocation3 [shape = 's32[1]{0}', space=sflag, size = 0x4, scoped, tag = 'scoped memory for patch_embed.1']
    %8 = vsyncpa [#allocation3], 0
    // Predicated region
    $region2: #{patch_embed.1} parent=1 // pred_check
      _
    $region3: #{patch_embed.1} parent=1 // pred_check_branch
      %10 = sbr.rel (0) target = $region5
    $region4: #{patch_embed.1} parent=1 // pred_region
      _
    $region5: #{patch_embed.1} parent=1 // pred_fallthru
      _
    // Predicated region
    $region6: #{patch_embed.1} parent=1 // pred_check
      _
    $region7: #{patch_embed.1} parent=1 // pred_check_branch
      %12 = sbr.rel (0) target = $region9
    $region8: #{patch_embed.1} parent=1 // pred_region
      _
    $region9: #{patch_embed.1} parent=1 // pred_fallthru
      _
    // Predicated region
    $region10: #{patch_embed.1} parent=1 // pred_check
      _
    $region11: #{patch_embed.1} parent=1 // pred_check_branch
      %14 = sbr.rel (0) target = $region13
    $region12: #{patch_embed.1} parent=1 // pred_region
      _
    $region13: #{patch_embed.1} parent=1 // pred_fallthru
      _
    %v16 = vld [vmem:[%s0] sm:$0xff]
    %v17 = vld [vmem:[%s1] sm:$0xf]
    %v18 = vld [vmem:[%s1 + $0x4] sm:$0xf]
    %v19 = vld [vmem:[%s1 + $0x8] sm:$0xf]
    %v20 = vld [vmem:[%s1 + $0xc] sm:$0xf]
    %v21 = vld [vmem:[%s1 + $0x10] sm:$0xf]
    %v22 = vld [vmem:[%s1 + $0x14] sm:$0xf]
    %v23 = vld [vmem:[%s1 + $0x18] sm:$0xf]
    %v24 = vld [vmem:[%s1 + $0x1c] sm:$0xf]
    %v25 = vld [vmem:[%s1 + $0x20] sm:$0xf]
    %v26 = vld [vmem:[%s1 + $0x24] sm:$0xf]
    %v27 = vld [vmem:[%s1 + $0x28] sm:$0xf]
    %v28 = vld [vmem:[%s1 + $0x2c] sm:$0xf]
    %v29 = vld [vmem:[%s1 + $0x30] sm:$0xf]
    %v30 = vld [vmem:[%s1 + $0x34] sm:$0xf]
    %v31 = vld [vmem:[%s1 + $0x38] sm:$0xf]
    %v32 = vld [vmem:[%s1 + $0x3c] sm:$0xf]
    %v33 = vld [vmem:[%s1 + $0x40] sm:$0xf]
    %v34 = vld [vmem:[%s1 + $0x44] sm:$0xf]
    %v35 = vld [vmem:[%s1 + $0x48] sm:$0xf]
    %v36 = vld [vmem:[%s1 + $0x4c] sm:$0xf]
    %v37 = vld [vmem:[%s1 + $0x50] sm:$0xf]
    %v38 = vld [vmem:[%s1 + $0x54] sm:$0xf]
    %v39 = vld [vmem:[%s1 + $0x58] sm:$0xf]
    %v40 = vld [vmem:[%s1 + $0x5c] sm:$0xf]
    %v41 = vld [vmem:[%s1 + $0x60] sm:$0xf]
    %v42 = vld [vmem:[%s1 + $0x64] sm:$0xf]
    %v43 = vld [vmem:[%s1 + $0x68] sm:$0xf]
    %v44 = vld [vmem:[%s1 + $0x6c] sm:$0xf]
    %v45 = vld [vmem:[%s1 + $0x70] sm:$0xf]
    %v46 = vld [vmem:[%s1 + $0x74] sm:$0xf]
    %v47 = vld [vmem:[%s1 + $0x78] sm:$0xf]
    %v48 = vld [vmem:[%s1 + $0x7c] sm:$0xf]
    %v49 = vld [vmem:[%s2] sm:$0x1]
    %v51 = vlaneseq
    %v52 = vshrl.u32 %v51, 7
    %v53 = vsub.s32 0, %v52
    %v54 = vrot.slane %v49, %v53
    %v57 = vunpack.c.l.b16 %v16
    %v58 = vunpack.c.h.b16 %v16
    %v59 = vpack.c.b16 %v57, %v57
    %v60 = vpack.c.b16 %v58, %v58
    %v95 = vunpack.c.l.b16 %v17
    %v96 = vunpack.c.l.b16 %v18
    %v97 = vunpack.c.l.b16 %v19
    %v98 = vunpack.c.l.b16 %v20
    %v99 = vunpack.c.l.b16 %v21
    %v100 = vunpack.c.l.b16 %v22
    %v101 = vunpack.c.l.b16 %v23
    %v102 = vunpack.c.l.b16 %v24
    %v103 = vunpack.c.l.b16 %v25
    %v104 = vunpack.c.l.b16 %v26
    %v105 = vunpack.c.l.b16 %v27
    %v106 = vunpack.c.l.b16 %v28
    %v107 = vunpack.c.l.b16 %v29
    %v108 = vunpack.c.l.b16 %v30
    %v109 = vunpack.c.l.b16 %v31
    %v110 = vunpack.c.l.b16 %v32
    %v111 = vunpack.c.l.b16 %v33
    %v112 = vunpack.c.l.b16 %v34
    %v113 = vunpack.c.l.b16 %v35
    %v114 = vunpack.c.l.b16 %v36
    %v115 = vunpack.c.l.b16 %v37
    %v116 = vunpack.c.l.b16 %v38
    %v117 = vunpack.c.l.b16 %v39
    %v118 = vunpack.c.l.b16 %v40
    %v119 = vunpack.c.l.b16 %v41
    %v120 = vunpack.c.l.b16 %v42
    %v121 = vunpack.c.l.b16 %v43
    %v122 = vunpack.c.l.b16 %v44
    %v123 = vunpack.c.l.b16 %v45
    %v124 = vunpack.c.l.b16 %v46
    %v125 = vunpack.c.l.b16 %v47
    %v126 = vunpack.c.l.b16 %v48
    %v127 = vpack.c.b16 %v96, %v95
    %v128 = vpack.c.b16 %v98, %v97
    %v129 = vpack.c.b16 %v100, %v99
    %v130 = vpack.c.b16 %v102, %v101
    %v131 = vpack.c.b16 %v104, %v103
    %v132 = vpack.c.b16 %v106, %v105
    %v133 = vpack.c.b16 %v108, %v107
    %v134 = vpack.c.b16 %v110, %v109
    %v135 = vpack.c.b16 %v112, %v111
    %v136 = vpack.c.b16 %v114, %v113
    %v137 = vpack.c.b16 %v116, %v115
    %v138 = vpack.c.b16 %v118, %v117
    %v139 = vpack.c.b16 %v120, %v119
    %v140 = vpack.c.b16 %v122, %v121
    %v141 = vpack.c.b16 %v124, %v123
    %v142 = vpack.c.b16 %v126, %v125
    %159 = vmatprep.subr.bf16.mxu0 0
    %160 = vmatpush1.bf16.msra.mxu0 %v134
    %161 = vmatprep.subr.bf16.mxu0 0
    %162 = vmatpush1.bf16.msra.mxu0 %v133
    %163 = vmatprep.subr.bf16.mxu0 0
    %164 = vmatpush1.bf16.msra.mxu0 %v132
    %165 = vmatprep.subr.bf16.mxu0 0
    %166 = vmatpush1.bf16.msra.mxu0 %v131
    %167 = vmatprep.subr.bf16.mxu0 0
    %168 = vmatpush1.bf16.msra.mxu0 %v130
    %169 = vmatprep.subr.bf16.mxu0 0
    %170 = vmatpush1.bf16.msra.mxu0 %v129
    %171 = vmatprep.subr.bf16.mxu0 0
    %172 = vmatpush1.bf16.msra.mxu0 %v128
    %173 = vmatprep.subr.bf16.mxu0 0
    %174 = vmatpush1.bf16.msra.mxu0 %v127
    %175 = vmatprep.subr.bf16.mxu0 0
    %176 = vmatpush2.bf16.msra.mxu0 %v142
    %177 = vmatprep.subr.bf16.mxu0 0
    %178 = vmatpush2.bf16.msra.mxu0 %v141
    %179 = vmatprep.subr.bf16.mxu0 0
    %180 = vmatpush2.bf16.msra.mxu0 %v140
    %181 = vmatprep.subr.bf16.mxu0 0
    %182 = vmatpush2.bf16.msra.mxu0 %v139
    %183 = vmatprep.subr.bf16.mxu0 0
    %184 = vmatpush2.bf16.msra.mxu0 %v138
    %185 = vmatprep.subr.bf16.mxu0 0
    %186 = vmatpush2.bf16.msra.mxu0 %v137
    %187 = vmatprep.subr.bf16.mxu0 0
    %188 = vmatpush2.bf16.msra.mxu0 %v136
    %189 = vmatprep.subr.bf16.mxu0 0
    %190 = vmatpush2.bf16.msra.mxu0 %v135
    %191 = vmatprep.mubr.bf16.mxu0 %v60
    %192 = vmatmul.mubr.bf16.gmra.mxu0 %v59
    %v193 = vpop.f32.mrf.mxu0
    %v194 = vadd.f32 %v54, %v193
    %v195 = vpop.f32.mrf.mxu0
    %v196 = vpop.f32.mrf.mxu0
    %v197 = vpop.f32.mrf.mxu0
    %198 = vdwg.mxu0
    %199 = vst [vmem:[#allocation2] sm:$0xff] %v194
    // Predicated region
    $region14: #{patch_embed.1} parent=1 // pred_check
      _
    $region15: #{patch_embed.1} parent=1 // pred_check_branch
      %201 = sbr.rel (0) target = $region17
    $region16: #{patch_embed.1} parent=1 // pred_region
      %s203 = ssub.s32 128, 128
      %204 = vsyncadd [#allocation3], %s203
      %s206 = sshll.u32 [#allocation2], 4
      %s207 = int_to_ptr.vmem [resolvable:$true] %s206
      %209 = dma.vmem_to_hbm [thread:$0]  %s207, 128, %s3, [#allocation3]
    $region17: #{patch_embed.1} parent=1 // pred_fallthru
      _
    // Predicated region
    $region18: #{patch_embed.1} parent=1 // pred_check
      _
    $region19: #{patch_embed.1} parent=1 // pred_check_branch
      %211 = sbr.rel (0) target = $region21
    $region20: #{patch_embed.1} parent=1 // pred_region
      %212 = dma.done [#allocation3], 128
    $region21: #{patch_embed.1} parent=1 // pred_fallthru
      _
    %213 = vsyncpa [#allocation3], 1

</llo_original>
